<compile_context>
chip_gen: v7x
topology: tpu7x:2x2x1
jax: 0.10.0
libtpu: 0.0.40
codegen_flags: <defaults>
</compile_context>

<pallas_src>
import functools
import math
from typing import NamedTuple

import jax
import jax.numpy as jnp
from jax import lax
from jax.experimental import pallas as pl
from jax.experimental.pallas import tpu as pltpu


# ---------------------------------------------------------------------------
# Hardware queries (defensive: fall back to conservative v7x numbers)
# ---------------------------------------------------------------------------
@functools.lru_cache(maxsize=1)
def _vmem_capacity_bytes():
    try:
        cap = getattr(pltpu.get_tpu_info(), "vmem_capacity_bytes", None)
        if isinstance(cap, int) and cap >= (16 << 20):
            return cap
    except Exception:
        pass
    return 64 << 20  # conservative: v7x per-TensorCore VMEM


@functools.lru_cache(maxsize=1)
def _num_tensorcores():
    try:
        info = pltpu.get_tpu_info()
    except Exception:
        return 1
    for name in ("num_tensorcores", "tensorcore_count", "num_cores"):
        n = getattr(info, name, None)
        if isinstance(n, int) and n >= 2:
            return 2  # v7x: 2 TensorCores per chip
    return 1


# ---------------------------------------------------------------------------
# Static tiling / layout plan (all Python ints -> hashable jit static arg)
# ---------------------------------------------------------------------------
class _Layout(NamedTuple):
    r: int           # image rows folded into the lane dim (lane width = r * W)
    th: int          # folded-row tile (block sublane extent)
    tc: int          # channel tile
    n_ct: int        # channel grid extent ("parallel" axis)
    n_rt: int        # row-tile grid extent ("arbitrary", clamped to the box)
    vmem_limit: int


def _plan(shape, dtype, row_tile=None, channel_splits=None):
    B, C, H, W = shape
    itemsize = jnp.dtype(dtype).itemsize
    sub = max(8, 32 // itemsize)  # sublane multiple: 8 f32 / 16 bf16 / 32 int8

    # Lane-dense layout: fold r rows into the lane dim so it is a multiple of
    # 128 (avoids masked vst.msk partial stores and padded VMEM tiles).
    if W % 128 == 0:
        r = 1
    else:
        r = 128 // math.gcd(W, 128)
        if r > 16 or H % r != 0:
            r = 1  # TODO(synk): pad H (or flatten H*W) for shapes that don't fold
    Wl = r * W
    Hr = H // r

    # v7x has two TensorCores: give the "parallel" channel axis extent >= 2 so
    # both cores stream roughly half the touched data. Only when it divides C.
    if channel_splits is None:
        channel_splits = _num_tensorcores()
    if channel_splits > 1 and C % channel_splits == 0:
        tc = C // channel_splits
    else:
        tc = C

    vmem_cap = _vmem_capacity_bytes()
    # ~4 blocks live (double-buffered in + out, aliased) + compiler scratch.
    block_cap = max(256 << 10, min(8 << 20, vmem_cap // 12))

    # Shrink channels only as a last resort (huge B * lane width).
    while tc > 1 and B * tc * min(sub, Hr) * Wl * itemsize > block_cap:
        tc = (tc + 1) // 2
    n_ct = pl.cdiv(C, tc)

    if row_tile is not None:
        th = min(int(row_tile), Hr)
        if th != Hr and th % sub != 0:
            raise ValueError(
                f"row_tile must be a multiple of {sub} for dtype {dtype} "
                f"or cover all {Hr} (folded) rows")
    elif Hr <= sub:
        th = Hr
    else:
        per_row = B * tc * Wl * itemsize
        th = max(sub, (block_cap // max(1, per_row)) // sub * sub)
        th = min(th, Hr)
    n_rt = pl.cdiv(Hr, th)

    block_bytes = B * tc * th * Wl * itemsize
    vmem_limit = int(min(vmem_cap * 3 // 4,
                         max(32 << 20, 4 * block_bytes + (4 << 20))))
    return _Layout(r, th, tc, n_ct, n_rt, vmem_limit)


# ---------------------------------------------------------------------------
# Pallas kernel: masked select between batch and batch rolled by 1 along dim 0
# ---------------------------------------------------------------------------
def _cutmix_image_kernel(info_ref, x_ref, o_ref, *, r, img_w):
    """x_ref / o_ref: (B, tc, th, r*W) VMEM blocks of the same HBM buffer.

    info_ref (SMEM int32): [x1, y1, x2, y2, row_tile_lo, row_tile_hi].
    The grid's row axis is clamped to [t_lo, t_hi] by the index_map; surplus
    iterations revisit t_hi and are skipped here.
    """
    x1 = info_ref[0]
    y1 = info_ref[1]
    x2 = info_ref[2]
    y2 = info_ref[3]
    t_lo = info_ref[4]
    t_hi = info_ref[5]
    ri = pl.program_id(1)  # row-tile grid position (innermost axis)

    B, tc, th, Wl = x_ref.shape

    @pl.when(t_lo + ri <= t_hi)  # first (and only needed) visit of this block
    def _():
        t = t_lo + ri                                   # actual row-tile index
        q = t * th + lax.broadcasted_iota(jnp.int32, (1, 1, th, Wl), 2)
        lane = lax.broadcasted_iota(jnp.int32, (1, 1, th, Wl), 3)
        base_row = q * r                                # original row of sub-row 0
        # Each folded row packs r original rows of width img_w along the lane
        # dim: lane l -> (sub_row s = l // img_w, col = l % img_w). r is small
        # and static, so the div/mod is unrolled into plain VPU compares.
        mask = None
        for s in range(r):
            row_s = base_row + s
            hit = ((lane >= s * img_w + x1) & (lane < s * img_w + x2)
                   & (row_s >= y1) & (row_s < y2))
            mask = hit if mask is None else (mask | hit)
        # Materialize the broadcast once; both stores reuse it.
        mask = jnp.broadcast_to(mask, (1, tc, th, Wl))
        # torch.roll(batch, 1, 0) realized as shifted slices of the same block:
        #   out[0]   = where(box, x[B-1], x[0])
        #   out[1:B] = where(box, x[0:B-1], x[1:B])
        o_ref[0:1] = jnp.where(mask, x_ref[B - 1:B], x_ref[0:1])
        if B > 1:
            o_ref[1:B] = jnp.where(mask, x_ref[0:B - 1], x_ref[1:B])


# ---------------------------------------------------------------------------
# Image mixing (pallas_call); jitted variants with / without batch donation
# ---------------------------------------------------------------------------
def _mix_images_impl(batch, box, layout):
    B, C, H, W = batch.shape
    r, th, tc, n_ct, n_rt, vmem_limit = layout
    Wl = r * W
    Hr = H // r
    x = batch.reshape(B, C, Hr, Wl)          # row-major fold: pure bitcast

    x1, y1, x2, y2 = box[0], box[1], box[2], box[3]
    q_lo = y1 // r
    q_hi = jnp.maximum(q_lo, (y2 - 1) // r)  # empty box -> q_hi == q_lo
    t_lo = q_lo // th
    t_hi = jnp.maximum(t_lo, q_hi // th)
    info = jnp.stack([x1, y1, x2, y2, t_lo, t_hi]).astype(jnp.int32)

    def idx_map(ci, ri, info_ref):
        # Clamp surplus row iterations to the last needed tile: same block
        # index -> Pallas skips the re-DMA; pl.when skips the recompute.
        return (0, ci, jnp.minimum(info_ref[4] + ri, info_ref[5]), 0)

    kernel = functools.partial(_cutmix_image_kernel, r=r, img_w=W)
    mixed = pl.pallas_call(
        kernel,
        out_shape=jax.ShapeDtypeStruct(x.shape, x.dtype),
        grid_spec=pltpu.PrefetchScalarGridSpec(
            num_scalar_prefetch=1,
            grid=(n_ct, n_rt),                        # rows innermost
            in_specs=[pl.BlockSpec((B, tc, th, Wl), idx_map)],
            out_specs=pl.BlockSpec((B, tc, th, Wl), idx_map),
        ),
        # Inputs are flattened including the scalar-prefetch arg, so the batch
        # is input index 1. Aliasing it to the output keeps untouched row
        # tiles in place (no read, no write).
        input_output_aliases={1: 0},
        compiler_params=pltpu.CompilerParams(
            dimension_semantics=("parallel", "arbitrary"),
            vmem_limit_bytes=vmem_limit),
    )(info, x)
    return mixed.reshape(B, C, H, W)


@functools.partial(jax.jit, static_argnums=(2,), donate_argnums=(0,))
def _mix_images_donated(batch, box, layout):
    return _mix_images_impl(batch, box, layout)


@functools.partial(jax.jit, static_argnums=(2,))
def _mix_images(batch, box, layout):
    return _mix_images_impl(batch, box, layout)


# ---------------------------------------------------------------------------
# Random parameters (scalar glue, plain JAX) -- same semantics as the module
# ---------------------------------------------------------------------------
def _cutmix_params(key, batch_shape, *, p, alpha):
    """Returns (box=[x1,y1,x2,y2] int32 (4,), lam float32 scalar)."""
    _, _, H, W = batch_shape
    k_apply, k_lam, k_rx, k_ry = jax.random.split(key, 4)
    apply_mix = jax.random.uniform(k_apply) < p              # torch.rand(1) < p
    lam0 = jax.random.beta(k_lam, alpha, alpha)              # Beta(alpha, alpha)
    r_x = jax.random.randint(k_rx, (), 0, W, dtype=jnp.int32)
    r_y = jax.random.randint(k_ry, (), 0, H, dtype=jnp.int32)
    r = 0.5 * jnp.sqrt(1.0 - lam0)
    r_w_half = jnp.floor(r * W).astype(jnp.int32)             # int(r * W)
    r_h_half = jnp.floor(r * H).astype(jnp.int32)             # int(r * H)
    x1 = jnp.clip(r_x - r_w_half, 0, None).astype(jnp.int32)
    y1 = jnp.clip(r_y - r_h_half, 0, None).astype(jnp.int32)
    x2 = jnp.clip(r_x + r_w_half, None, W).astype(jnp.int32)
    y2 = jnp.clip(r_y + r_h_half, None, H).astype(jnp.int32)
    lam_adj = 1.0 - ((x2 - x1) * (y2 - y1)).astype(jnp.float32) / float(W * H)

    # If not applied, collapse the box (empty) and force lam = 1 -> identity.
    zero = jnp.int32(0)
    x1 = jnp.where(apply_mix, x1, zero)
    y1 = jnp.where(apply_mix, y1, zero)
    x2 = jnp.where(apply_mix, x2, zero)
    y2 = jnp.where(apply_mix, y2, zero)
    lam = jnp.where(apply_mix, lam_adj, 1.0).astype(jnp.float32)
    box = jnp.stack([x1, y1, x2, y2]).astype(jnp.int32)
    return box, lam


# ---------------------------------------------------------------------------
# Apply CutMix given explicit (box, lam)
# ---------------------------------------------------------------------------
def _apply_cutmix(batch, target, box, lam, num_classes, *, row_tile=None,
                  channel_splits=None, donate_batch=True):
    layout = _plan(batch.shape, batch.dtype, row_tile=row_tile,
                   channel_splits=channel_splits)
    mix_fn = _mix_images_donated if donate_batch else _mix_images
    mixed_batch = mix_fn(batch, box, layout)

    # Target blend: a few KB -> plain jnp, computed in f32, cast to batch dtype
    # (matches the PyTorch module's `.to(dtype=batch.dtype)` semantics).
    t32 = jax.nn.one_hot(target, num_classes, dtype=jnp.float32)
    mixed_target = (lam * t32 + (1.0 - lam) * jnp.roll(t32, 1, axis=0))
    mixed_target = mixed_target.astype(batch.dtype)
    return mixed_batch, mixed_target


# ---------------------------------------------------------------------------
# Public entry point: functional equivalent of RandomCutmix.forward
# ---------------------------------------------------------------------------
def random_cutmix(key, batch, target, *, num_classes, p=0.5, alpha=1.0,
                  row_tile=None, channel_splits=None, donate_batch=True):
    """With donate_batch=True (default) the batch buffer is donated to the
    mixing kernel, so the input/output alias avoids any hidden full copy.
    Pass donate_batch=False if you need `batch` after the call."""
    if batch.ndim != 4:
        raise ValueError(f"Batch ndim should be 4. Got {batch.ndim}")
    if target.ndim != 1:
        raise ValueError(f"Target ndim should be 1. Got {target.ndim}")
    if not jnp.issubdtype(batch.dtype, jnp.floating):
        raise TypeError(f"Batch dtype should be a float tensor. Got {batch.dtype}.")
    box, lam = _cutmix_params(key, batch.shape, p=p, alpha=alpha)
    return _apply_cutmix(batch, target, box, lam, num_classes,
                         row_tile=row_tile, channel_splits=channel_splits,
                         donate_batch=donate_batch)


# ---------------------------------------------------------------------------
# Pure-jnp reference (for in-script correctness checks)
# ---------------------------------------------------------------------------
def _reference_cutmix(batch, target, box, lam, num_classes):
    _, _, H, W = batch.shape
    x1, y1, x2, y2 = box[0], box[1], box[2], box[3]
    rows = jnp.arange(H)[:, None]
    cols = jnp.arange(W)[None, :]
    mask = (rows >= y1) & (rows < y2) & (cols >= x1) & (cols < x2)
    mixed = jnp.where(mask[None, None], jnp.roll(batch, 1, axis=0), batch)
    t32 = jax.nn.one_hot(target, num_classes, dtype=jnp.float32)
    mt = lam * t32 + (1.0 - lam) * jnp.roll(t32, 1, axis=0)
    return mixed, mt.astype(batch.dtype)


if __name__ == "__main__":
    num_classes = 8
    B, C, H, W = 2, 4, 16, 16

    key = jax.random.PRNGKey(0)
    k_data, k_tgt, k_mix = jax.random.split(key, 3)
    batch = jax.random.normal(k_data, (B, C, H, W), dtype=jnp.float32)
    target = jax.random.randint(k_tgt, (B,), 0, num_classes, dtype=jnp.int32)

    # Headline end-to-end call (donated throwaway buffer -> no hidden copy),
    # p=1.0 so the cutmix hot path is always exercised.
    mixed_batch, mixed_target = random_cutmix(
        k_mix, batch + 0.0, target, num_classes=num_classes, p=1.0, alpha=1.0)
    jax.block_until_ready(mixed_batch)
    jax.block_until_ready(mixed_target)
    assert mixed_batch.shape == (B, C, H, W)
    assert mixed_target.shape == (B, num_classes)
    assert bool(jnp.allclose(mixed_target.sum(axis=-1), 1.0, atol=1e-5))

    # Correctness self-checks vs. the pure-jnp reference (donate_batch=False so
    # the original arrays stay alive across checks).
    def check(bt, tg, box, lam, **kw):
        ref_b, ref_t = _reference_cutmix(bt, tg, box, lam, num_classes)
        got_b, got_t = _apply_cutmix(bt, tg, box, lam, num_classes,
                                     donate_batch=False, **kw)
        jax.block_until_ready(got_b)
        assert bool(jnp.allclose(got_b, ref_b)), f"image mismatch ({kw})"
        assert bool(jnp.allclose(got_t, ref_t, atol=1e-6)), f"target mismatch ({kw})"

    # 1) folded-lane layout (W=16 -> 128 lanes): applied + not-applied paths.
    for p_, k_ in ((1.0, k_mix), (1.0, jax.random.fold_in(k_mix, 1)), (0.0, k_mix)):
        box_, lam_ = _cutmix_params(k_, (B, C, H, W), p=p_, alpha=1.0)
        check(batch, target, box_, lam_)

    # 2) lane-native layout (W=128) with small row tiles -> exercises the
    #    clamped row-tile grid; also an explicit 2-way channel split (v7x path).
    B2, C2, H2, W2 = 2, 4, 32, 128
    b2 = jax.random.normal(jax.random.fold_in(key, 2), (B2, C2, H2, W2), jnp.float32)
    t2 = jax.random.randint(jax.random.fold_in(key, 3), (B2,), 0, num_classes, jnp.int32)
    box2, lam2 = _cutmix_params(jax.random.fold_in(k_mix, 2),
                                (B2, C2, H2, W2), p=1.0, alpha=1.0)
    check(b2, t2, box2, lam2, row_tile=8)
    check(b2, t2, box2, lam2, channel_splits=2)

    # 3) bf16 path (16-row sublane multiple).
    check(b2.astype(jnp.bfloat16), t2, box2, lam2, row_tile=16)

    # 4) fallback: width not foldable to 128 lanes (H % r != 0) -> full-dim block.
    B4, C4, H4, W4 = 2, 3, 12, 24
    b4 = jax.random.normal(jax.random.fold_in(key, 4), (B4, C4, H4, W4), jnp.float32)
    t4 = jax.random.randint(jax.random.fold_in(key, 5), (B4,), 0, num_classes, jnp.int32)
    box4, lam4 = _cutmix_params(jax.random.fold_in(k_mix, 4),
                                (B4, C4, H4, W4), p=1.0, alpha=1.0)
    check(b4, t4, box4, lam4)

    print("KERNEL_OK")
</pallas_src>

<mosaic_0001>
module attributes {stable_mosaic.version = 11 : i64} {
  func.func @_cutmix_image_kernel(%arg0: i32, %arg1: i32, %arg2: memref<6xi32, #tpu.memory_space<smem>>, %arg3: memref<2x4x2x128xf32, #tpu.memory_space<vmem>>, %arg4: memref<2x4x2x128xf32, #tpu.memory_space<vmem>>) attributes {dimension_semantics = [#tpu.dimension_semantics<parallel>, #tpu.dimension_semantics<arbitrary>], iteration_bounds = array<i64: 1, 1>, scalar_prefetch = 1 : i64, scratch_operands = 0 : i64, tpu.core_type = #tpu.core_type<tc>, window_params = [{transform_indices = @transform_0, window_bounds = array<i64: 2, 4, 2, 128>}, {transform_indices = @transform_1, window_bounds = array<i64: 2, 4, 2, 128>}]} {
    %c0 = arith.constant 0 : index
    %0 = memref.load %arg2[%c0] : memref<6xi32, #tpu.memory_space<smem>>
    %c1 = arith.constant 1 : index
    %1 = memref.load %arg2[%c1] : memref<6xi32, #tpu.memory_space<smem>>
    %c2 = arith.constant 2 : index
    %2 = memref.load %arg2[%c2] : memref<6xi32, #tpu.memory_space<smem>>
    %c3 = arith.constant 3 : index
    %3 = memref.load %arg2[%c3] : memref<6xi32, #tpu.memory_space<smem>>
    %c4 = arith.constant 4 : index
    %4 = memref.load %arg2[%c4] : memref<6xi32, #tpu.memory_space<smem>>
    %c5 = arith.constant 5 : index
    %5 = memref.load %arg2[%c5] : memref<6xi32, #tpu.memory_space<smem>>
    %6 = arith.addi %4, %arg1 : i32
    %7 = arith.cmpi sle, %6, %5 : i32
    %8 = arith.extui %7 : i1 to i32
    %c0_i32 = arith.constant 0 : i32
    %9 = arith.cmpi ne, %8, %c0_i32 : i32
    scf.if %9 {
      %10 = arith.addi %4, %arg1 : i32
      %c2_i32 = arith.constant 2 : i32
      %11 = arith.muli %10, %c2_i32 : i32
      %12 = tpu.iota {dimensions = array<i32: 2>} : vector<1x1x2x128xi32>
      %13 = vector.broadcast %11 : i32 to vector<1x1x2x128xi32>
      %14 = arith.addi %13, %12 : vector<1x1x2x128xi32>
      %15 = tpu.iota {dimensions = array<i32: 3>} : vector<1x1x2x128xi32>
      %c8_i32 = arith.constant 8 : i32
      %16 = vector.broadcast %c8_i32 : i32 to vector<1x1x2x128xi32>
      %17 = arith.muli %14, %16 : vector<1x1x2x128xi32>
      %c0_i32_0 = arith.constant 0 : i32
      %18 = vector.broadcast %c0_i32_0 : i32 to vector<1x1x2x128xi32>
      %19 = arith.addi %17, %18 : vector<1x1x2x128xi32>
      %c0_i32_1 = arith.constant 0 : i32
      %20 = arith.addi %c0_i32_1, %0 : i32
      %21 = vector.broadcast %20 : i32 to vector<1x1x2x128xi32>
      %22 = arith.cmpi sge, %15, %21 : vector<1x1x2x128xi32>
      %c0_i32_2 = arith.constant 0 : i32
      %23 = arith.addi %c0_i32_2, %2 : i32
      %24 = vector.broadcast %23 : i32 to vector<1x1x2x128xi32>
      %25 = arith.cmpi slt, %15, %24 : vector<1x1x2x128xi32>
      %26 = arith.andi %22, %25 : vector<1x1x2x128xi1>
      %27 = vector.broadcast %1 : i32 to vector<1x1x2x128xi32>
      %28 = arith.cmpi sge, %19, %27 : vector<1x1x2x128xi32>
      %29 = arith.andi %26, %28 : vector<1x1x2x128xi1>
      %30 = vector.broadcast %3 : i32 to vector<1x1x2x128xi32>
      %31 = arith.cmpi slt, %19, %30 : vector<1x1x2x128xi32>
      %32 = arith.andi %29, %31 : vector<1x1x2x128xi1>
      %c1_i32 = arith.constant 1 : i32
      %33 = vector.broadcast %c1_i32 : i32 to vector<1x1x2x128xi32>
      %34 = arith.addi %17, %33 : vector<1x1x2x128xi32>
      %c16_i32 = arith.constant 16 : i32
      %35 = arith.addi %c16_i32, %0 : i32
      %36 = vector.broadcast %35 : i32 to vector<1x1x2x128xi32>
      %37 = arith.cmpi sge, %15, %36 : vector<1x1x2x128xi32>
      %c16_i32_3 = arith.constant 16 : i32
      %38 = arith.addi %c16_i32_3, %2 : i32
      %39 = vector.broadcast %38 : i32 to vector<1x1x2x128xi32>
      %40 = arith.cmpi slt, %15, %39 : vector<1x1x2x128xi32>
      %41 = arith.andi %37, %40 : vector<1x1x2x128xi1>
      %42 = vector.broadcast %1 : i32 to vector<1x1x2x128xi32>
      %43 = arith.cmpi sge, %34, %42 : vector<1x1x2x128xi32>
      %44 = arith.andi %41, %43 : vector<1x1x2x128xi1>
      %45 = vector.broadcast %3 : i32 to vector<1x1x2x128xi32>
      %46 = arith.cmpi slt, %34, %45 : vector<1x1x2x128xi32>
      %47 = arith.andi %44, %46 : vector<1x1x2x128xi1>
      %48 = arith.ori %32, %47 : vector<1x1x2x128xi1>
      %c2_i32_4 = arith.constant 2 : i32
      %49 = vector.broadcast %c2_i32_4 : i32 to vector<1x1x2x128xi32>
      %50 = arith.addi %17, %49 : vector<1x1x2x128xi32>
      %c32_i32 = arith.constant 32 : i32
      %51 = arith.addi %c32_i32, %0 : i32
      %52 = vector.broadcast %51 : i32 to vector<1x1x2x128xi32>
      %53 = arith.cmpi sge, %15, %52 : vector<1x1x2x128xi32>
      %c32_i32_5 = arith.constant 32 : i32
      %54 = arith.addi %c32_i32_5, %2 : i32
      %55 = vector.broadcast %54 : i32 to vector<1x1x2x128xi32>
      %56 = arith.cmpi slt, %15, %55 : vector<1x1x2x128xi32>
      %57 = arith.andi %53, %56 : vector<1x1x2x128xi1>
      %58 = vector.broadcast %1 : i32 to vector<1x1x2x128xi32>
      %59 = arith.cmpi sge, %50, %58 : vector<1x1x2x128xi32>
      %60 = arith.andi %57, %59 : vector<1x1x2x128xi1>
      %61 = vector.broadcast %3 : i32 to vector<1x1x2x128xi32>
      %62 = arith.cmpi slt, %50, %61 : vector<1x1x2x128xi32>
      %63 = arith.andi %60, %62 : vector<1x1x2x128xi1>
      %64 = arith.ori %48, %63 : vector<1x1x2x128xi1>
      %c3_i32 = arith.constant 3 : i32
      %65 = vector.broadcast %c3_i32 : i32 to vector<1x1x2x128xi32>
      %66 = arith.addi %17, %65 : vector<1x1x2x128xi32>
      %c48_i32 = arith.constant 48 : i32
      %67 = arith.addi %c48_i32, %0 : i32
      %68 = vector.broadcast %67 : i32 to vector<1x1x2x128xi32>
      %69 = arith.cmpi sge, %15, %68 : vector<1x1x2x128xi32>
      %c48_i32_6 = arith.constant 48 : i32
      %70 = arith.addi %c48_i32_6, %2 : i32
      %71 = vector.broadcast %70 : i32 to vector<1x1x2x128xi32>
      %72 = arith.cmpi slt, %15, %71 : vector<1x1x2x128xi32>
      %73 = arith.andi %69, %72 : vector<1x1x2x128xi1>
      %74 = vector.broadcast %1 : i32 to vector<1x1x2x128xi32>
      %75 = arith.cmpi sge, %66, %74 : vector<1x1x2x128xi32>
      %76 = arith.andi %73, %75 : vector<1x1x2x128xi1>
      %77 = vector.broadcast %3 : i32 to vector<1x1x2x128xi32>
      %78 = arith.cmpi slt, %66, %77 : vector<1x1x2x128xi32>
      %79 = arith.andi %76, %78 : vector<1x1x2x128xi1>
      %80 = arith.ori %64, %79 : vector<1x1x2x128xi1>
      %c4_i32 = arith.constant 4 : i32
      %81 = vector.broadcast %c4_i32 : i32 to vector<1x1x2x128xi32>
      %82 = arith.addi %17, %81 : vector<1x1x2x128xi32>
      %c64_i32 = arith.constant 64 : i32
      %83 = arith.addi %c64_i32, %0 : i32
      %84 = vector.broadcast %83 : i32 to vector<1x1x2x128xi32>
      %85 = arith.cmpi sge, %15, %84 : vector<1x1x2x128xi32>
      %c64_i32_7 = arith.constant 64 : i32
      %86 = arith.addi %c64_i32_7, %2 : i32
      %87 = vector.broadcast %86 : i32 to vector<1x1x2x128xi32>
      %88 = arith.cmpi slt, %15, %87 : vector<1x1x2x128xi32>
      %89 = arith.andi %85, %88 : vector<1x1x2x128xi1>
      %90 = vector.broadcast %1 : i32 to vector<1x1x2x128xi32>
      %91 = arith.cmpi sge, %82, %90 : vector<1x1x2x128xi32>
      %92 = arith.andi %89, %91 : vector<1x1x2x128xi1>
      %93 = vector.broadcast %3 : i32 to vector<1x1x2x128xi32>
      %94 = arith.cmpi slt, %82, %93 : vector<1x1x2x128xi32>
      %95 = arith.andi %92, %94 : vector<1x1x2x128xi1>
      %96 = arith.ori %80, %95 : vector<1x1x2x128xi1>
      %c5_i32 = arith.constant 5 : i32
      %97 = vector.broadcast %c5_i32 : i32 to vector<1x1x2x128xi32>
      %98 = arith.addi %17, %97 : vector<1x1x2x128xi32>
      %c80_i32 = arith.constant 80 : i32
      %99 = arith.addi %c80_i32, %0 : i32
      %100 = vector.broadcast %99 : i32 to vector<1x1x2x128xi32>
      %101 = arith.cmpi sge, %15, %100 : vector<1x1x2x128xi32>
      %c80_i32_8 = arith.constant 80 : i32
      %102 = arith.addi %c80_i32_8, %2 : i32
      %103 = vector.broadcast %102 : i32 to vector<1x1x2x128xi32>
      %104 = arith.cmpi slt, %15, %103 : vector<1x1x2x128xi32>
      %105 = arith.andi %101, %104 : vector<1x1x2x128xi1>
      %106 = vector.broadcast %1 : i32 to vector<1x1x2x128xi32>
      %107 = arith.cmpi sge, %98, %106 : vector<1x1x2x128xi32>
      %108 = arith.andi %105, %107 : vector<1x1x2x128xi1>
      %109 = vector.broadcast %3 : i32 to vector<1x1x2x128xi32>
      %110 = arith.cmpi slt, %98, %109 : vector<1x1x2x128xi32>
      %111 = arith.andi %108, %110 : vector<1x1x2x128xi1>
      %112 = arith.ori %96, %111 : vector<1x1x2x128xi1>
      %c6_i32 = arith.constant 6 : i32
      %113 = vector.broadcast %c6_i32 : i32 to vector<1x1x2x128xi32>
      %114 = arith.addi %17, %113 : vector<1x1x2x128xi32>
      %c96_i32 = arith.constant 96 : i32
      %115 = arith.addi %c96_i32, %0 : i32
      %116 = vector.broadcast %115 : i32 to vector<1x1x2x128xi32>
      %117 = arith.cmpi sge, %15, %116 : vector<1x1x2x128xi32>
      %c96_i32_9 = arith.constant 96 : i32
      %118 = arith.addi %c96_i32_9, %2 : i32
      %119 = vector.broadcast %118 : i32 to vector<1x1x2x128xi32>
      %120 = arith.cmpi slt, %15, %119 : vector<1x1x2x128xi32>
      %121 = arith.andi %117, %120 : vector<1x1x2x128xi1>
      %122 = vector.broadcast %1 : i32 to vector<1x1x2x128xi32>
      %123 = arith.cmpi sge, %114, %122 : vector<1x1x2x128xi32>
      %124 = arith.andi %121, %123 : vector<1x1x2x128xi1>
      %125 = vector.broadcast %3 : i32 to vector<1x1x2x128xi32>
      %126 = arith.cmpi slt, %114, %125 : vector<1x1x2x128xi32>
      %127 = arith.andi %124, %126 : vector<1x1x2x128xi1>
      %128 = arith.ori %112, %127 : vector<1x1x2x128xi1>
      %c7_i32 = arith.constant 7 : i32
      %129 = vector.broadcast %c7_i32 : i32 to vector<1x1x2x128xi32>
      %130 = arith.addi %17, %129 : vector<1x1x2x128xi32>
      %c112_i32 = arith.constant 112 : i32
      %131 = arith.addi %c112_i32, %0 : i32
      %132 = vector.broadcast %131 : i32 to vector<1x1x2x128xi32>
      %133 = arith.cmpi sge, %15, %132 : vector<1x1x2x128xi32>
      %c112_i32_10 = arith.constant 112 : i32
      %134 = arith.addi %c112_i32_10, %2 : i32
      %135 = vector.broadcast %134 : i32 to vector<1x1x2x128xi32>
      %136 = arith.cmpi slt, %15, %135 : vector<1x1x2x128xi32>
      %137 = arith.andi %133, %136 : vector<1x1x2x128xi1>
      %138 = vector.broadcast %1 : i32 to vector<1x1x2x128xi32>
      %139 = arith.cmpi sge, %130, %138 : vector<1x1x2x128xi32>
      %140 = arith.andi %137, %139 : vector<1x1x2x128xi1>
      %141 = vector.broadcast %3 : i32 to vector<1x1x2x128xi32>
      %142 = arith.cmpi slt, %130, %141 : vector<1x1x2x128xi32>
      %143 = arith.andi %140, %142 : vector<1x1x2x128xi1>
      %144 = arith.ori %128, %143 : vector<1x1x2x128xi1>
      %145 = vector.shape_cast %144 : vector<1x1x2x128xi1> to vector<1x1x2x128xi1>
      %146 = vector.broadcast %145 : vector<1x1x2x128xi1> to vector<1x4x2x128xi1>
      %c1_11 = arith.constant 1 : index
      %c0_12 = arith.constant 0 : index
      %c0_13 = arith.constant 0 : index
      %c0_14 = arith.constant 0 : index
      %147 = vector.load %arg3[%c1_11, %c0_12, %c0_13, %c0_14] : memref<2x4x2x128xf32, #tpu.memory_space<vmem>>, vector<1x4x2x128xf32>
      %c0_15 = arith.constant 0 : index
      %c0_16 = arith.constant 0 : index
      %c0_17 = arith.constant 0 : index
      %c0_18 = arith.constant 0 : index
      %148 = vector.load %arg3[%c0_15, %c0_16, %c0_17, %c0_18] : memref<2x4x2x128xf32, #tpu.memory_space<vmem>>, vector<1x4x2x128xf32>
      %149 = arith.select %146, %147, %148 : vector<1x4x2x128xi1>, vector<1x4x2x128xf32>
      %c0_19 = arith.constant 0 : index
      %c0_20 = arith.constant 0 : index
      %c0_21 = arith.constant 0 : index
      %c0_22 = arith.constant 0 : index
      %150 = vector.load %arg4[%c0_19, %c0_20, %c0_21, %c0_22] : memref<2x4x2x128xf32, #tpu.memory_space<vmem>>, vector<1x4x2x128xf32>
      tpu.vector_store %arg4[%c0_19, %c0_20, %c0_21, %c0_22], %149 {strides = array<i32>} : memref<2x4x2x128xf32, #tpu.memory_space<vmem>>, vector<1x4x2x128xf32>,
      %c0_23 = arith.constant 0 : index
      %c0_24 = arith.constant 0 : index
      %c0_25 = arith.constant 0 : index
      %c0_26 = arith.constant 0 : index
      %151 = vector.load %arg3[%c0_23, %c0_24, %c0_25, %c0_26] : memref<2x4x2x128xf32, #tpu.memory_space<vmem>>, vector<1x4x2x128xf32>
      %c1_27 = arith.constant 1 : index
      %c0_28 = arith.constant 0 : index
      %c0_29 = arith.constant 0 : index
      %c0_30 = arith.constant 0 : index
      %152 = vector.load %arg3[%c1_27, %c0_28, %c0_29, %c0_30] : memref<2x4x2x128xf32, #tpu.memory_space<vmem>>, vector<1x4x2x128xf32>
      %153 = arith.select %146, %151, %152 : vector<1x4x2x128xi1>, vector<1x4x2x128xf32>
      %c1_31 = arith.constant 1 : index
      %c0_32 = arith.constant 0 : index
      %c0_33 = arith.constant 0 : index
      %c0_34 = arith.constant 0 : index
      %154 = vector.load %arg4[%c1_31, %c0_32, %c0_33, %c0_34] : memref<2x4x2x128xf32, #tpu.memory_space<vmem>>, vector<1x4x2x128xf32>
      tpu.vector_store %arg4[%c1_31, %c0_32, %c0_33, %c0_34], %153 {strides = array<i32>} : memref<2x4x2x128xf32, #tpu.memory_space<vmem>>, vector<1x4x2x128xf32>,
    } else {
    }
    return
  }
  func.func @transform_0(%arg0: i32, %arg1: i32, %arg2: memref<6xi32, #tpu.memory_space<smem>>) -> (i32, i32, i32, i32) {
    %c4 = arith.constant 4 : index
    %0 = memref.load %arg2[%c4] : memref<6xi32, #tpu.memory_space<smem>>
    %1 = arith.addi %0, %arg1 : i32
    %c5 = arith.constant 5 : index
    %2 = memref.load %arg2[%c5] : memref<6xi32, #tpu.memory_space<smem>>
    %3 = arith.minsi %1, %2 : i32
    %c0_i32 = arith.constant 0 : i32
    %c0_i32_0 = arith.constant 0 : i32
    %c0_i32_1 = arith.constant 0 : i32
    return %c0_i32, %arg0, %3, %c0_i32_0 : i32, i32, i32, i32
  }
  func.func @transform_1(%arg0: i32, %arg1: i32, %arg2: memref<6xi32, #tpu.memory_space<smem>>) -> (i32, i32, i32, i32) {
    %c4 = arith.constant 4 : index
    %0 = memref.load %arg2[%c4] : memref<6xi32, #tpu.memory_space<smem>>
    %1 = arith.addi %0, %arg1 : i32
    %c5 = arith.constant 5 : index
    %2 = memref.load %arg2[%c5] : memref<6xi32, #tpu.memory_space<smem>>
    %3 = arith.minsi %1, %2 : i32
    %c0_i32 = arith.constant 0 : i32
    %c0_i32_0 = arith.constant 0 : i32
    %c0_i32_1 = arith.constant 0 : i32
    return %c0_i32, %arg0, %3, %c0_i32_0 : i32, i32, i32, i32
  }
}

</mosaic_0001>

<llo_original>
// kernel: _mix_images_donated.1
$region0: #{_mix_images_donated.1}
  #allocation0 [shape = 'u32[]', space=smem, size = 0x4, offset = 0x4, fixed_abs, tag = 'smem constant byte address 0x4 - core index']
  #allocation1 [shape = 'u32[144,128]{1,0:T(1,128)}', space=vmem, size = 0x12000, scoped, tag = 'internal scratch']
  #allocation2 [shape = 's32[1]{0}', space=sflag, size = 0x4, scoped, tag = 'scoped memory for _mix_images_donated.1']
  #allocation3 [shape = 'u8[512]{0}', space=smem, size = 0x200, scoped, tag = 'prefetched SMEM operand 0']
  %s0 = inlined_call_operand.vmem [shape: s32[6], index: 0, kind: input, shape index: {}]
  %s1 = inlined_call_operand.vmem [shape: f32[2,4,2,128], index: 1, kind: input, shape index: {}, may-alias: {1,2}]
  %s2 = inlined_call_operand.vmem [shape: f32[2,4,2,128], index: 2, kind: output, shape index: {}, may-alias: {1,2}]
  %s3 = sld [smem:[#allocation0]]
  $region18: #{_mix_images_donated.1} parent=0
    _
  %s5 = ssub.s32 1, %s3
  %s6 = scalar_select 0, %s5, %s3
  %s7 = sshll.u32 %s0, 4
  %s8 = int_to_ptr.vmem [resolvable:$true] %s7
  %10 = dma.vmem_to_smem %s8, 16, [#allocation3], [#allocation2]
  %11 = dma.done [#allocation2], 16
  %12 = sfence
  // Predicated region
  $region2: #{_mix_images_donated.1} parent=0 // pred_check
    _
  $region3: #{_mix_images_donated.1} parent=0 // pred_check_branch
    %14 = sbr.rel (0) target = $region5
  $region4: #{_mix_images_donated.1} parent=0 // pred_region
    %s15 = sld [smem:[#allocation3 + $0x4]]
    %s16 = sadd.s32 %s15, 0
    %s17 = sld [smem:[#allocation3 + $0x5]]
    %p18 = scmp.lt.s32.totalorder %s16, %s17
    %s19 = scalar_select %p18, %s16, %s17
    %p20 = scmp.lt.s32.totalorder %s19, 0
    %s21 = scalar_select %p20, %s19, 0
    %s22 = smul.addr %s21, 2
    %s23 = scalar_lea.vmem %s1, %s22
    %s24 = sld [smem:[#allocation3 + $0x4]]
    %s25 = sadd.s32 %s24, 0
    %s26 = sld [smem:[#allocation3 + $0x5]]
    %p27 = scmp.lt.s32.totalorder %s25, %s26
    %s28 = scalar_select %p27, %s25, %s26
  $region5: #{_mix_images_donated.1} parent=0 // pred_fallthru
    _
  %s29 = sld [smem:[#allocation3 + $0x4]]
  %s30 = sadd.s32 %s29, 0
  %s31 = sld [smem:[#allocation3 + $0x5]]
  %p32 = scmp.lt.s32.totalorder %s30, %s31
  %s33 = scalar_select %p32, %s30, %s31
  %p34 = scmp.lt.s32.totalorder %s33, 0
  %s35 = scalar_select %p34, %s33, 0
  %s36 = smul.addr %s35, 2
  %s37 = scalar_lea.vmem %s1, %s36
  %s38 = sld [smem:[#allocation3 + $0x4]]
  %s39 = sadd.s32 %s38, 0
  %s40 = sld [smem:[#allocation3 + $0x5]]
  %p41 = scmp.lt.s32.totalorder %s39, %s40
  %s42 = scalar_select %p41, %s39, %s40
  %p43 = scmp.lt.s32.totalorder %s42, 0
  %s44 = scalar_select %p43, %s42, 0
  %s45 = smul.addr %s44, 2
  %s46 = scalar_lea.vmem %s2, %s45
  %s47 = sld [smem:[#allocation3 + $0x4]]
  %s48 = sadd.s32 %s47, 0
  %s49 = sld [smem:[#allocation3 + $0x5]]
  %p50 = scmp.lt.s32.totalorder %s48, %s49
  %s51 = scalar_select %p50, %s48, %s49
  %p52 = scmp.lt.s32.totalorder %s51, 0
  %s53 = scalar_select %p52, %s51, 0
  %s54 = smul.addr %s53, 2
  %s55 = scalar_lea.vmem %s1, %s54
  %s56 = sld [smem:[#allocation3 + $0x4]]
  %s57 = sadd.s32 %s56, 0
  %s58 = sld [smem:[#allocation3 + $0x5]]
  %p59 = scmp.lt.s32.totalorder %s57, %s58
  %s60 = scalar_select %p59, %s57, %s58
  %s61 = sld [smem:[#allocation3 + $0x4]]
  %s62 = sadd.s32 %s61, 0
  %s63 = sld [smem:[#allocation3 + $0x5]]
  %p64 = scmp.lt.s32.totalorder %s62, %s63
  %s65 = scalar_select %p64, %s62, %s63
  %p66 = scmp.lt.s32.totalorder %s65, 0
  %s67 = scalar_select %p66, %s65, 0
  %s68 = smul.addr %s67, 2
  %s69 = scalar_lea.vmem %s2, %s68
  %s70 = sld [smem:[#allocation3 + $0x4]]
  %s71 = sadd.s32 %s70, 0
  %s72 = sld [smem:[#allocation3 + $0x5]]
  %p73 = scmp.lt.s32.totalorder %s71, %s72
  %s74 = scalar_select %p73, %s71, %s72
  %s75 = sld [smem:[#allocation3]]
  %s76 = sld [smem:[#allocation3 + $0x1]]
  %s77 = sld [smem:[#allocation3 + $0x2]]
  %s78 = sld [smem:[#allocation3 + $0x3]]
  %s79 = sld [smem:[#allocation3 + $0x4]]
  %s80 = sld [smem:[#allocation3 + $0x5]]
  %s81 = sadd.s32 %s79, 0
  %p82 = scmp.le.s32.totalorder %s81, %s80
  // Predicated region
  $region6: #{_mix_images_donated.1} parent=0 // pred_check
    %p83 = pneg %p82
  $region7: #{_mix_images_donated.1} parent=0 // pred_check_branch
    %85 = sbr.rel (%p83) target = $region9
  $region8: #{_mix_images_donated.1} parent=0 // pred_region
    %s86 = smul.u32 %s81, 2
    %v87 = vlaneseq
    %v88 = vshrl.u32 %v87, 7
    %v89 = vstv %s86
    %v90 = vadd.s32 %v89, %v88
    %v91 = vlaneseq
    %v92 = vand.u32 %v91, 127
    %v93 = vmul.u32 %v90, 8
    %v94 = vstv %s75
    %vm95 = vcmp.ge.s32.totalorder %v92, %v94
    %v96 = vstv %s77
    %vm97 = vcmp.lt.s32.totalorder %v92, %v96
    %vm98 = vmand %vm95, %vm97
    %v99 = vstv %s76
    %vm100 = vcmp.ge.s32.totalorder %v93, %v99
    %vm101 = vmand %vm98, %vm100
    %v102 = vstv %s78
    %vm103 = vcmp.lt.s32.totalorder %v93, %v102
    %vm104 = vmand %vm101, %vm103
    %v105 = vadd.s32 %v93, 1
    %s106 = sadd.s32 %s75, 16
    %v107 = vstv %s106
    %vm108 = vcmp.ge.s32.totalorder %v92, %v107
    %s109 = sadd.s32 %s77, 16
    %v110 = vstv %s109
    %vm111 = vcmp.lt.s32.totalorder %v92, %v110
    %vm112 = vmand %vm108, %vm111
    %vm113 = vcmp.ge.s32.totalorder %v105, %v99
    %vm114 = vmand %vm112, %vm113
    %vm115 = vcmp.lt.s32.totalorder %v105, %v102
    %vm116 = vmand %vm114, %vm115
    %vm117 = vmor %vm104, %vm116
    %v118 = vadd.s32 %v93, 2
    %s119 = sadd.s32 %s75, 32
    %v120 = vstv %s119
    %vm121 = vcmp.ge.s32.totalorder %v92, %v120
    %s122 = sadd.s32 %s77, 32
    %v123 = vstv %s122
    %vm124 = vcmp.lt.s32.totalorder %v92, %v123
    %vm125 = vmand %vm121, %vm124
    %vm126 = vcmp.ge.s32.totalorder %v118, %v99
    %vm127 = vmand %vm125, %vm126
    %vm128 = vcmp.lt.s32.totalorder %v118, %v102
    %vm129 = vmand %vm127, %vm128
    %vm130 = vmor %vm117, %vm129
    %v131 = vadd.s32 %v93, 3
    %s132 = sadd.s32 %s75, 48
    %v133 = vstv %s132
    %vm134 = vcmp.ge.s32.totalorder %v92, %v133
    %s135 = sadd.s32 %s77, 48
    %v136 = vstv %s135
    %vm137 = vcmp.lt.s32.totalorder %v92, %v136
    %vm138 = vmand %vm134, %vm137
    %vm139 = vcmp.ge.s32.totalorder %v131, %v99
    %vm140 = vmand %vm138, %vm139
    %vm141 = vcmp.lt.s32.totalorder %v131, %v102
    %vm142 = vmand %vm140, %vm141
    %vm143 = vmor %vm130, %vm142
    %v144 = vadd.s32 %v93, 4
    %s145 = sadd.s32 %s75, 64
    %v146 = vstv %s145
    %vm147 = vcmp.ge.s32.totalorder %v92, %v146
    %s148 = sadd.s32 %s77, 64
    %v149 = vstv %s148
    %vm150 = vcmp.lt.s32.totalorder %v92, %v149
    %vm151 = vmand %vm147, %vm150
    %vm152 = vcmp.ge.s32.totalorder %v144, %v99
    %vm153 = vmand %vm151, %vm152
    %vm154 = vcmp.lt.s32.totalorder %v144, %v102
    %vm155 = vmand %vm153, %vm154
    %vm156 = vmor %vm143, %vm155
    %v157 = vadd.s32 %v93, 5
    %s158 = sadd.s32 %s75, 80
    %v159 = vstv %s158
    %vm160 = vcmp.ge.s32.totalorder %v92, %v159
    %s161 = sadd.s32 %s77, 80
    %v162 = vstv %s161
    %vm163 = vcmp.lt.s32.totalorder %v92, %v162
    %vm164 = vmand %vm160, %vm163
    %vm165 = vcmp.ge.s32.totalorder %v157, %v99
    %vm166 = vmand %vm164, %vm165
    %vm167 = vcmp.lt.s32.totalorder %v157, %v102
    %vm168 = vmand %vm166, %vm167
    %vm169 = vmor %vm156, %vm168
    %v170 = vadd.s32 %v93, 6
    %s171 = sadd.s32 %s75, 96
    %v172 = vstv %s171
    %vm173 = vcmp.ge.s32.totalorder %v92, %v172
    %s174 = sadd.s32 %s77, 96
    %v175 = vstv %s174
    %vm176 = vcmp.lt.s32.totalorder %v92, %v175
    %vm177 = vmand %vm173, %vm176
    %vm178 = vcmp.ge.s32.totalorder %v170, %v99
    %vm179 = vmand %vm177, %vm178
    %vm180 = vcmp.lt.s32.totalorder %v170, %v102
    %vm181 = vmand %vm179, %vm180
    %vm182 = vmor %vm169, %vm181
    %v183 = vadd.s32 %v93, 7
    %s184 = sadd.s32 %s75, 112
    %v185 = vstv %s184
    %vm186 = vcmp.ge.s32.totalorder %v92, %v185
    %s187 = sadd.s32 %s77, 112
    %v188 = vstv %s187
    %vm189 = vcmp.lt.s32.totalorder %v92, %v188
    %vm190 = vmand %vm186, %vm189
    %vm191 = vcmp.ge.s32.totalorder %v183, %v99
    %vm192 = vmand %vm190, %vm191
    %vm193 = vcmp.lt.s32.totalorder %v183, %v102
    %vm194 = vmand %vm192, %vm193
    %vm195 = vmor %vm182, %vm194
    %v196 = vsel %vm195, 1, 0
    %vm197 = vcmp.eq.s32.totalorder %v196, 1
    %s198 = scalar_lea.vmem %s55, 8
    %v199 = vld [vmem:[%s198] sm:$0x3]
    %v200 = vld [vmem:[%s198 + $0x2] sm:$0x3]
    %v201 = vld [vmem:[%s198 + $0x4] sm:$0x3]
    %v202 = vld [vmem:[%s198 + $0x6] sm:$0x3]
    %v203 = vld [vmem:[%s55] sm:$0x3]
    %v204 = vld [vmem:[%s55 + $0x2] sm:$0x3]
    %v205 = vld [vmem:[%s55 + $0x4] sm:$0x3]
    %v206 = vld [vmem:[%s55 + $0x6] sm:$0x3]
    %v207 = vsel %vm197, %v199, %v203
    %v208 = vsel %vm197, %v200, %v204
    %v209 = vsel %vm197, %v201, %v205
    %v210 = vsel %vm197, %v202, %v206
    %211 = vst [vmem:[%s69] sm:$0x3] %v207
    %212 = vst [vmem:[%s69 + $0x2] sm:$0x3] %v208
    %213 = vst [vmem:[%s69 + $0x4] sm:$0x3] %v209
    %214 = vst [vmem:[%s69 + $0x6] sm:$0x3] %v210
    %v215 = vld [vmem:[%s55] sm:$0x3]
    %v216 = vld [vmem:[%s55 + $0x2] sm:$0x3]
    %v217 = vld [vmem:[%s55 + $0x4] sm:$0x3]
    %v218 = vld [vmem:[%s55 + $0x6] sm:$0x3]
    %v219 = vld [vmem:[%s198] sm:$0x3]
    %v220 = vld [vmem:[%s198 + $0x2] sm:$0x3]
    %v221 = vld [vmem:[%s198 + $0x4] sm:$0x3]
    %v222 = vld [vmem:[%s198 + $0x6] sm:$0x3]
    %v223 = vsel %vm197, %v215, %v219
    %v224 = vsel %vm197, %v216, %v220
    %v225 = vsel %vm197, %v217, %v221
    %v226 = vsel %vm197, %v218, %v222
    %s227 = scalar_lea.vmem %s69, 8
    %228 = vst [vmem:[%s227] sm:$0x3] %v223
    %229 = vst [vmem:[%s227 + $0x2] sm:$0x3] %v224
    %230 = vst [vmem:[%s227 + $0x4] sm:$0x3] %v225
    %231 = vst [vmem:[%s227 + $0x6] sm:$0x3] %v226
  $region9: #{_mix_images_donated.1} parent=0 // pred_fallthru
    _
  %s232 = sld [smem:[#allocation3 + $0x4]]
  %s233 = sadd.s32 %s232, 0
  %s234 = sld [smem:[#allocation3 + $0x5]]
  %p235 = scmp.lt.s32.totalorder %s233, %s234
  %s236 = scalar_select %p235, %s233, %s234
  %p237 = scmp.lt.s32.totalorder %s236, 0
  %s238 = scalar_select %p237, %s236, 0
  %s239 = smul.addr %s238, 2
  %s240 = scalar_lea.vmem %s2, %s239
  // Predicated region
  $region10: #{_mix_images_donated.1} parent=0 // pred_check
    _
  $region11: #{_mix_images_donated.1} parent=0 // pred_check_branch
    %242 = sbr.rel (0) target = $region13
  $region12: #{_mix_images_donated.1} parent=0 // pred_region
    %s243 = sld [smem:[#allocation3 + $0x4]]
    %s244 = sadd.s32 %s243, 0
    %s245 = sld [smem:[#allocation3 + $0x5]]
    %p246 = scmp.lt.s32.totalorder %s244, %s245
    %s247 = scalar_select %p246, %s244, %s245
  $region13: #{_mix_images_donated.1} parent=0 // pred_fallthru
    _
  // Predicated region
  $region14: #{_mix_images_donated.1} parent=0 // pred_check
    _
  $region15: #{_mix_images_donated.1} parent=0 // pred_check_branch
    %249 = sbr.rel (0) target = $region17
  $region16: #{_mix_images_donated.1} parent=0 // pred_region
    %s250 = sld [smem:[#allocation3 + $0x4]]
    %s251 = sadd.s32 %s250, 0
    %s252 = sld [smem:[#allocation3 + $0x5]]
    %p253 = scmp.lt.s32.totalorder %s251, %s252
    %s254 = scalar_select %p253, %s251, %s252
    %p255 = scmp.lt.s32.totalorder %s254, 0
    %s256 = scalar_select %p255, %s254, 0
    %s257 = smul.addr %s256, 2
    %s258 = scalar_lea.vmem %s2, %s257
  $region17: #{_mix_images_donated.1} parent=0 // pred_fallthru
    _

</llo_original>
